<compile_context>
chip_gen: v5e
topology: v5e:2x2
jax: 0.10.0
libtpu: 0.0.40
codegen_flags: <defaults>
</compile_context>

<pallas_src>
import functools
import math

import numpy as np
import jax
import jax.numpy as jnp
from jax.experimental import pallas as pl
from jax.experimental.pallas import tpu as pltpu

# ---- model hyperparameters (small, consistent with the module defaults) ----
INPUT_DIM = 32          # continuous state dim
ACT_DIM = 4             # Box action space -> float actions
HIDDEN = (64, 64)       # hidden_sizes (scaled down from [256, 256])
STATE_HEAD = 64         # state_head_size
REWARD_HEAD = 32        # reward_head_size
GAMMA_HEAD = 32         # gamma_head_size

HEAD_FUSED = STATE_HEAD + REWARD_HEAD + GAMMA_HEAD   # 128 -> fully lane-dense
REWARD_COL = INPUT_DIM                               # column 32 of the slab
GAMMA_COL = INPUT_DIM + 1                            # column 33 of the slab
OUT_WIDTH = 40                                       # trimmed output slab width
assert INPUT_DIM + 2 <= OUT_WIDTH
assert HEAD_FUSED == 128

ACT_COMPUTE_DTYPE = jnp.bfloat16   # MXU input dtype for activations / weights


def _round_up(n, m):
    return ((n + m - 1) // m) * m


# --------------------------------- kernel ----------------------------------
def _transition_kernel(x_ref, a_ref,
                       w1x_ref, w1a_ref, b1_ref,
                       w2_ref, b2_ref,
                       wh1_ref, bh1_ref,
                       wh2_ref, bh2_ref,
                       out_ref):
    """Fused trunk + three heads for one batch tile, lane-dense output slab."""

    def affine(x, w_ref, b_ref):
        # bf16 MXU inputs, f32 accumulation; bias add / activations stay f32.
        return jnp.dot(x.astype(w_ref.dtype), w_ref[...],
                       preferred_element_type=jnp.float32) + b_ref[...]

    x = x_ref[...]
    a = a_ref[...]

    # shared_layers[0]: (x | acts) @ W1 + b1 without materializing the concat.
    h = (jnp.dot(x.astype(w1x_ref.dtype), w1x_ref[...],
                 preferred_element_type=jnp.float32)
         + jnp.dot(a.astype(w1a_ref.dtype), w1a_ref[...],
                   preferred_element_type=jnp.float32)
         + b1_ref[...])
    h = jnp.maximum(h, 0.0)

    # shared_layers[1]
    z = jnp.maximum(affine(h, w2_ref, b2_ref), 0.0)

    # fused head first layers: [state | reward | gamma] -> 128 lanes, one matmul
    hh = jnp.maximum(affine(z, wh1_ref, bh1_ref), 0.0)

    # fused block-diagonal head second layers -> (TB, OUT_WIDTH) slab
    slab = affine(hh, wh2_ref, bh2_ref)

    # sigmoid only on the gamma column (EUP slot; hidden under DMA anyway)
    col = jax.lax.broadcasted_iota(jnp.int32, slab.shape, 1)
    slab = jnp.where(col == GAMMA_COL, jax.nn.sigmoid(slab), slab)

    out_ref[...] = slab.astype(out_ref.dtype)


def _full_spec(shape):
    # whole-array block, replicated (constant) across the batch grid axis
    return pl.BlockSpec(shape, lambda i: (0,) * len(shape))


# -------------------------------- wrapper -----------------------------------
@functools.partial(jax.jit, static_argnames=("batch_tile",))
def continuous_transition_forward_slab(x, acts, packed, *, batch_tile=2048):
    """Runs the fused kernel; returns the raw (B, OUT_WIDTH) output slab."""
    B = x.shape[0]
    x = x.reshape(B, INPUT_DIM).astype(ACT_COMPUTE_DTYPE)
    acts = acts.reshape(B, ACT_DIM).astype(ACT_COMPUTE_DTYPE)

    # Tile selection: minimize batch padding while keeping >= 2 grid steps so
    # both v7x TensorCores get work, and rows 8-aligned for sublane tiling.
    num_tiles = max(2, pl.cdiv(B, batch_tile))
    tile = _round_up(pl.cdiv(B, num_tiles), 8)
    b_pad = tile * num_tiles
    if b_pad != B:                        # handle B not divisible by the tile
        x = jnp.pad(x, ((0, b_pad - B), (0, 0)))
        acts = jnp.pad(acts, ((0, b_pad - B), (0, 0)))

    # ~5 KiB of VMEM per tile row (double-buffered I/O + f32 intermediates);
    # keep generous headroom but stay under every generation's physical VMEM.
    vmem_limit = int(min(48 * 1024 * 1024,
                         max(32 * 1024 * 1024, tile * 5 * 1024)))

    grid = (num_tiles,)
    in_specs = [
        pl.BlockSpec((tile, INPUT_DIM), lambda i: (i, 0)),
        pl.BlockSpec((tile, ACT_DIM), lambda i: (i, 0)),
    ] + [_full_spec(p.shape) for p in packed]
    out_specs = pl.BlockSpec((tile, OUT_WIDTH), lambda i: (i, 0))

    slab = pl.pallas_call(
        _transition_kernel,
        out_shape=jax.ShapeDtypeStruct((b_pad, OUT_WIDTH), jnp.float32),
        grid_spec=pltpu.PrefetchScalarGridSpec(
            num_scalar_prefetch=0,
            grid=grid,
            in_specs=in_specs,
            out_specs=out_specs,
        ),
        compiler_params=pltpu.CompilerParams(
            dimension_semantics=("parallel",),
            vmem_limit_bytes=vmem_limit),
    )(x, acts, *packed)
    return slab[:B]


@functools.partial(jax.jit, static_argnames=("batch_tile",))
def continuous_transition_forward(x, acts, packed, *, batch_tile=2048):
    """Forward pass. Returns (states, reward, gamma)."""
    slab = continuous_transition_forward_slab(x, acts, packed,
                                              batch_tile=batch_tile)
    states = slab[:, :INPUT_DIM]                      # logits_to_state == identity
    reward = slab[:, REWARD_COL:REWARD_COL + 1]
    gamma = slab[:, GAMMA_COL:GAMMA_COL + 1]
    return states, reward, gamma


# -------------------------- parameter construction --------------------------
def _linear_params(key, fan_in, fan_out):
    """PyTorch nn.Linear default init: U(-1/sqrt(fan_in), 1/sqrt(fan_in))."""
    kw, kb = jax.random.split(key)
    bound = 1.0 / math.sqrt(fan_in)
    w = jax.random.uniform(kw, (fan_in, fan_out), jnp.float32, -bound, bound)
    b = jax.random.uniform(kb, (1, fan_out), jnp.float32, -bound, bound)
    return w, b


def make_params(key):
    d_embed = INPUT_DIM + ACT_DIM
    dims = [
        (d_embed, HIDDEN[0]),        # shared_layers[0]
        (HIDDEN[0], HIDDEN[1]),      # shared_layers[1]
        (HIDDEN[1], STATE_HEAD),     # state_head[0]
        (STATE_HEAD, INPUT_DIM),     # state_head[2]
        (HIDDEN[1], REWARD_HEAD),    # reward_head[0]
        (REWARD_HEAD, 1),            # reward_head[2]
        (HIDDEN[1], GAMMA_HEAD),     # gamma_head[0]
        (GAMMA_HEAD, 1),             # gamma_head[2]
    ]
    keys = jax.random.split(key, len(dims))
    return [_linear_params(k, fi, fo) for k, (fi, fo) in zip(keys, dims)]


def pack_params(params, dtype=ACT_COMPUTE_DTYPE):
    """Fuse/repack the 8 Linear layers into kernel-friendly operands."""
    ((w1, b1), (w2, b2),
     (ws1, bs1), (ws2, bs2),
     (wr1, br1), (wr2, br2),
     (wg1, bg1), (wg2, bg2)) = params

    # split shared_layers[0] so the wrapper never materializes concat([x, acts])
    w1x = w1[:INPUT_DIM]
    w1a = w1[INPUT_DIM:]

    # fuse the three head first layers along lanes -> (HIDDEN, 128)
    wh1 = jnp.concatenate([ws1, wr1, wg1], axis=1)
    bh1 = jnp.concatenate([bs1, br1, bg1], axis=1)

    # fuse the three head second layers into a block-diagonal (128, OUT_WIDTH)
    wh2 = jnp.zeros((HEAD_FUSED, OUT_WIDTH), jnp.float32)
    wh2 = wh2.at[:STATE_HEAD, :INPUT_DIM].set(ws2)
    wh2 = wh2.at[STATE_HEAD:STATE_HEAD + REWARD_HEAD,
                 REWARD_COL:REWARD_COL + 1].set(wr2)
    wh2 = wh2.at[STATE_HEAD + REWARD_HEAD:,
                 GAMMA_COL:GAMMA_COL + 1].set(wg2)
    bh2 = jnp.zeros((1, OUT_WIDTH), jnp.float32)
    bh2 = bh2.at[:, :INPUT_DIM].set(bs2)
    bh2 = bh2.at[:, REWARD_COL:REWARD_COL + 1].set(br2)
    bh2 = bh2.at[:, GAMMA_COL:GAMMA_COL + 1].set(bg2)

    wcast = lambda w: w.astype(dtype)          # MXU-native weights
    bcast = lambda b: b.astype(jnp.float32)    # biases stay f32

    return [wcast(w1x), wcast(w1a), bcast(b1),
            wcast(w2), bcast(b2),
            wcast(wh1), bcast(bh1),
            wcast(wh2), bcast(bh2)]


# ------------------------------ pure-JAX reference ---------------------------
def reference_forward(x, acts, params, dtype=ACT_COMPUTE_DTYPE):
    """Un-fused reference (weights rounded to the same dtype as the kernel)."""
    cast = lambda w: w.astype(dtype).astype(jnp.float32)
    aff = lambda v, w, b: v @ cast(w) + b
    x = x.reshape(x.shape[0], INPUT_DIM)
    xe = jnp.concatenate([x, acts], axis=1)
    h = jax.nn.relu(aff(xe, *params[0]))
    z = jax.nn.relu(aff(h, *params[1]))
    s = aff(jax.nn.relu(aff(z, *params[2])), *params[3])
    r = aff(jax.nn.relu(aff(z, *params[4])), *params[5])
    g = jax.nn.sigmoid(aff(jax.nn.relu(aff(z, *params[6])), *params[7]))
    return s, r, g


# ----------------------------------- demo -----------------------------------
if __name__ == "__main__":
    key = jax.random.PRNGKey(0)
    k_params, k_x, k_a, k_x2, k_a2 = jax.random.split(key, 5)

    params = make_params(k_params)
    packed = pack_params(params)

    # small demo batch
    B1 = 8
    x1 = jax.random.normal(k_x, (B1, INPUT_DIM), jnp.float32)
    a1 = jax.random.normal(k_a, (B1, ACT_DIM), jnp.float32)
    s1, r1, g1 = continuous_transition_forward(x1, a1, packed)
    jax.block_until_ready((s1, r1, g1))

    # non-divisible batch -> exercises minimal padding + 2-step (megacore) grid
    B2 = 600
    x2 = jax.random.normal(k_x2, (B2, INPUT_DIM), jnp.float32)
    a2 = jax.random.normal(k_a2, (B2, ACT_DIM), jnp.float32)
    s2, r2, g2 = continuous_transition_forward(x2, a2, packed)
    jax.block_until_ready((s2, r2, g2))

    assert s1.shape == (B1, INPUT_DIM) and r1.shape == (B1, 1) and g1.shape == (B1, 1)
    assert s2.shape == (B2, INPUT_DIM) and r2.shape == (B2, 1) and g2.shape == (B2, 1)
    assert bool(jnp.all((g1 >= 0.0) & (g1 <= 1.0)))
    assert bool(jnp.all((g2 >= 0.0) & (g2 <= 1.0)))

    for (x, a, outs) in [(x1, a1, (s1, r1, g1)), (x2, a2, (s2, r2, g2))]:
        refs = reference_forward(x, a, params)
        for got, ref in zip(outs, refs):
            np.testing.assert_allclose(np.asarray(got), np.asarray(ref),
                                       atol=5e-2, rtol=5e-2)

    print("KERNEL_OK")
</pallas_src>

<mosaic_0001>
module attributes {stable_mosaic.version = 11 : i64} {
  func.func @_transition_kernel(%arg0: i32, %arg1: memref<8x32xbf16, #tpu.memory_space<vmem>>, %arg2: memref<8x4xbf16, #tpu.memory_space<vmem>>, %arg3: memref<32x64xbf16, #tpu.memory_space<vmem>>, %arg4: memref<4x64xbf16, #tpu.memory_space<vmem>>, %arg5: memref<1x64xf32, #tpu.memory_space<vmem>>, %arg6: memref<64x64xbf16, #tpu.memory_space<vmem>>, %arg7: memref<1x64xf32, #tpu.memory_space<vmem>>, %arg8: memref<64x128xbf16, #tpu.memory_space<vmem>>, %arg9: memref<1x128xf32, #tpu.memory_space<vmem>>, %arg10: memref<128x40xbf16, #tpu.memory_space<vmem>>, %arg11: memref<1x40xf32, #tpu.memory_space<vmem>>, %arg12: memref<8x40xf32, #tpu.memory_space<vmem>>) attributes {dimension_semantics = [#tpu.dimension_semantics<parallel>], iteration_bounds = array<i64: 2>, scalar_prefetch = 0 : i64, scratch_operands = 0 : i64, tpu.core_type = #tpu.core_type<tc>, window_params = [{transform_indices = @transform_0, window_bounds = array<i64: 8, 32>}, {transform_indices = @transform_1, window_bounds = array<i64: 8, 4>}, {pipeline_mode = #tpu.pipeline_mode<synchronous>, transform_indices = @transform_2, window_bounds = array<i64: 32, 64>}, {pipeline_mode = #tpu.pipeline_mode<synchronous>, transform_indices = @transform_3, window_bounds = array<i64: 4, 64>}, {pipeline_mode = #tpu.pipeline_mode<synchronous>, transform_indices = @transform_4, window_bounds = array<i64: 1, 64>}, {pipeline_mode = #tpu.pipeline_mode<synchronous>, transform_indices = @transform_5, window_bounds = array<i64: 64, 64>}, {pipeline_mode = #tpu.pipeline_mode<synchronous>, transform_indices = @transform_6, window_bounds = array<i64: 1, 64>}, {pipeline_mode = #tpu.pipeline_mode<synchronous>, transform_indices = @transform_7, window_bounds = array<i64: 64, 128>}, {pipeline_mode = #tpu.pipeline_mode<synchronous>, transform_indices = @transform_8, window_bounds = array<i64: 1, 128>}, {pipeline_mode = #tpu.pipeline_mode<synchronous>, transform_indices = @transform_9, window_bounds = array<i64: 128, 40>}, {pipeline_mode = #tpu.pipeline_mode<synchronous>, transform_indices = @transform_10, window_bounds = array<i64: 1, 40>}, {transform_indices = @transform_11, window_bounds = array<i64: 8, 40>}]} {
    %c0 = arith.constant 0 : index
    %c0_0 = arith.constant 0 : index
    %0 = vector.load %arg1[%c0, %c0_0] : memref<8x32xbf16, #tpu.memory_space<vmem>>, vector<8x32xbf16>
    %c0_1 = arith.constant 0 : index
    %c0_2 = arith.constant 0 : index
    %1 = vector.load %arg2[%c0_1, %c0_2] : memref<8x4xbf16, #tpu.memory_space<vmem>>, vector<8x4xbf16>
    %c0_3 = arith.constant 0 : index
    %c0_4 = arith.constant 0 : index
    %2 = vector.load %arg3[%c0_3, %c0_4] : memref<32x64xbf16, #tpu.memory_space<vmem>>, vector<32x64xbf16>
    %cst = arith.constant dense<0.000000e+00> : vector<8x64xf32>
    %3 = tpu.matmul %0, %2, %cst {dimension_numbers = #tpu.dot_dimension_numbers<[1], [0], [0], [1], [0, 0, 1, 1], [], []>} : vector<8x32xbf16>, vector<32x64xbf16>, vector<8x64xf32> -> vector<8x64xf32>
    %c0_5 = arith.constant 0 : index
    %c0_6 = arith.constant 0 : index
    %4 = vector.load %arg4[%c0_5, %c0_6] : memref<4x64xbf16, #tpu.memory_space<vmem>>, vector<4x64xbf16>
    %cst_7 = arith.constant dense<0.000000e+00> : vector<8x64xf32>
    %5 = tpu.matmul %1, %4, %cst_7 {dimension_numbers = #tpu.dot_dimension_numbers<[1], [0], [0], [1], [0, 0, 1, 1], [], []>} : vector<8x4xbf16>, vector<4x64xbf16>, vector<8x64xf32> -> vector<8x64xf32>
    %6 = arith.addf %3, %5 : vector<8x64xf32>
    %c0_8 = arith.constant 0 : index
    %c0_9 = arith.constant 0 : index
    %7 = vector.load %arg5[%c0_8, %c0_9] : memref<1x64xf32, #tpu.memory_space<vmem>>, vector<1x64xf32>
    %8 = vector.broadcast %7 : vector<1x64xf32> to vector<8x64xf32>
    %9 = arith.addf %6, %8 : vector<8x64xf32>
    %cst_10 = arith.constant 0.000000e+00 : f32
    %10 = vector.broadcast %cst_10 : f32 to vector<8x64xf32>
    %11 = arith.maximumf %9, %10 : vector<8x64xf32>
    %12 = arith.truncf %11 : vector<8x64xf32> to vector<8x64xbf16>
    %c0_11 = arith.constant 0 : index
    %c0_12 = arith.constant 0 : index
    %13 = vector.load %arg6[%c0_11, %c0_12] : memref<64x64xbf16, #tpu.memory_space<vmem>>, vector<64x64xbf16>
    %cst_13 = arith.constant dense<0.000000e+00> : vector<8x64xf32>
    %14 = tpu.matmul %12, %13, %cst_13 {dimension_numbers = #tpu.dot_dimension_numbers<[1], [0], [0], [1], [0, 0, 1, 1], [], []>} : vector<8x64xbf16>, vector<64x64xbf16>, vector<8x64xf32> -> vector<8x64xf32>
    %c0_14 = arith.constant 0 : index
    %c0_15 = arith.constant 0 : index
    %15 = vector.load %arg7[%c0_14, %c0_15] : memref<1x64xf32, #tpu.memory_space<vmem>>, vector<1x64xf32>
    %16 = vector.broadcast %15 : vector<1x64xf32> to vector<8x64xf32>
    %17 = arith.addf %14, %16 : vector<8x64xf32>
    %cst_16 = arith.constant 0.000000e+00 : f32
    %18 = vector.broadcast %cst_16 : f32 to vector<8x64xf32>
    %19 = arith.maximumf %17, %18 : vector<8x64xf32>
    %20 = arith.truncf %19 : vector<8x64xf32> to vector<8x64xbf16>
    %c0_17 = arith.constant 0 : index
    %c0_18 = arith.constant 0 : index
    %21 = vector.load %arg8[%c0_17, %c0_18] : memref<64x128xbf16, #tpu.memory_space<vmem>>, vector<64x128xbf16>
    %cst_19 = arith.constant dense<0.000000e+00> : vector<8x128xf32>
    %22 = tpu.matmul %20, %21, %cst_19 {dimension_numbers = #tpu.dot_dimension_numbers<[1], [0], [0], [1], [0, 0, 1, 1], [], []>} : vector<8x64xbf16>, vector<64x128xbf16>, vector<8x128xf32> -> vector<8x128xf32>
    %c0_20 = arith.constant 0 : index
    %c0_21 = arith.constant 0 : index
    %23 = vector.load %arg9[%c0_20, %c0_21] : memref<1x128xf32, #tpu.memory_space<vmem>>, vector<1x128xf32>
    %24 = vector.broadcast %23 : vector<1x128xf32> to vector<8x128xf32>
    %25 = arith.addf %22, %24 : vector<8x128xf32>
    %cst_22 = arith.constant 0.000000e+00 : f32
    %26 = vector.broadcast %cst_22 : f32 to vector<8x128xf32>
    %27 = arith.maximumf %25, %26 : vector<8x128xf32>
    %28 = arith.truncf %27 : vector<8x128xf32> to vector<8x128xbf16>
    %c0_23 = arith.constant 0 : index
    %c0_24 = arith.constant 0 : index
    %29 = vector.load %arg10[%c0_23, %c0_24] : memref<128x40xbf16, #tpu.memory_space<vmem>>, vector<128x40xbf16>
    %cst_25 = arith.constant dense<0.000000e+00> : vector<8x40xf32>
    %30 = tpu.matmul %28, %29, %cst_25 {dimension_numbers = #tpu.dot_dimension_numbers<[1], [0], [0], [1], [0, 0, 1, 1], [], []>} : vector<8x128xbf16>, vector<128x40xbf16>, vector<8x40xf32> -> vector<8x40xf32>
    %c0_26 = arith.constant 0 : index
    %c0_27 = arith.constant 0 : index
    %31 = vector.load %arg11[%c0_26, %c0_27] : memref<1x40xf32, #tpu.memory_space<vmem>>, vector<1x40xf32>
    %32 = vector.broadcast %31 : vector<1x40xf32> to vector<8x40xf32>
    %33 = arith.addf %30, %32 : vector<8x40xf32>
    %34 = tpu.iota {dimensions = array<i32: 1>} : vector<8x40xi32>
    %c33_i32 = arith.constant 33 : i32
    %35 = vector.broadcast %c33_i32 : i32 to vector<8x40xi32>
    %36 = arith.cmpi eq, %34, %35 : vector<8x40xi32>
    %37 = arith.negf %33 : vector<8x40xf32>
    %38 = math.exp %37 : vector<8x40xf32>
    %cst_28 = arith.constant 1.000000e+00 : f32
    %39 = vector.broadcast %cst_28 : f32 to vector<8x40xf32>
    %40 = arith.addf %39, %38 : vector<8x40xf32>
    %41 = arith.divf %39, %40 : vector<8x40xf32>
    %42 = arith.select %36, %41, %33 : vector<8x40xi1>, vector<8x40xf32>
    %c0_29 = arith.constant 0 : index
    %c0_30 = arith.constant 0 : index
    %43 = vector.load %arg12[%c0_29, %c0_30] : memref<8x40xf32, #tpu.memory_space<vmem>>, vector<8x40xf32>
    tpu.vector_store %arg12[%c0_29, %c0_30], %42 {strides = array<i32>} : memref<8x40xf32, #tpu.memory_space<vmem>>, vector<8x40xf32>,
    return
  }
  func.func @transform_0(%arg0: i32) -> (i32, i32) {
    %c0_i32 = arith.constant 0 : i32
    %c0_i32_0 = arith.constant 0 : i32
    return %arg0, %c0_i32 : i32, i32
  }
  func.func @transform_1(%arg0: i32) -> (i32, i32) {
    %c0_i32 = arith.constant 0 : i32
    %c0_i32_0 = arith.constant 0 : i32
    return %arg0, %c0_i32 : i32, i32
  }
  func.func @transform_2(%arg0: i32) -> (i32, i32) {
    %c0_i32 = arith.constant 0 : i32
    %c0_i32_0 = arith.constant 0 : i32
    %c0_i32_1 = arith.constant 0 : i32
    return %c0_i32, %c0_i32_0 : i32, i32
  }
  func.func @transform_3(%arg0: i32) -> (i32, i32) {
    %c0_i32 = arith.constant 0 : i32
    %c0_i32_0 = arith.constant 0 : i32
    %c0_i32_1 = arith.constant 0 : i32
    return %c0_i32, %c0_i32_0 : i32, i32
  }
  func.func @transform_4(%arg0: i32) -> (i32, i32) {
    %c0_i32 = arith.constant 0 : i32
    %c0_i32_0 = arith.constant 0 : i32
    %c0_i32_1 = arith.constant 0 : i32
    return %c0_i32, %c0_i32_0 : i32, i32
  }
  func.func @transform_5(%arg0: i32) -> (i32, i32) {
    %c0_i32 = arith.constant 0 : i32
    %c0_i32_0 = arith.constant 0 : i32
    %c0_i32_1 = arith.constant 0 : i32
    return %c0_i32, %c0_i32_0 : i32, i32
  }
  func.func @transform_6(%arg0: i32) -> (i32, i32) {
    %c0_i32 = arith.constant 0 : i32
    %c0_i32_0 = arith.constant 0 : i32
    %c0_i32_1 = arith.constant 0 : i32
    return %c0_i32, %c0_i32_0 : i32, i32
  }
  func.func @transform_7(%arg0: i32) -> (i32, i32) {
    %c0_i32 = arith.constant 0 : i32
    %c0_i32_0 = arith.constant 0 : i32
    %c0_i32_1 = arith.constant 0 : i32
    return %c0_i32, %c0_i32_0 : i32, i32
  }
  func.func @transform_8(%arg0: i32) -> (i32, i32) {
    %c0_i32 = arith.constant 0 : i32
    %c0_i32_0 = arith.constant 0 : i32
    %c0_i32_1 = arith.constant 0 : i32
    return %c0_i32, %c0_i32_0 : i32, i32
  }
  func.func @transform_9(%arg0: i32) -> (i32, i32) {
    %c0_i32 = arith.constant 0 : i32
    %c0_i32_0 = arith.constant 0 : i32
    %c0_i32_1 = arith.constant 0 : i32
    return %c0_i32, %c0_i32_0 : i32, i32
  }
  func.func @transform_10(%arg0: i32) -> (i32, i32) {
    %c0_i32 = arith.constant 0 : i32
    %c0_i32_0 = arith.constant 0 : i32
    %c0_i32_1 = arith.constant 0 : i32
    return %c0_i32, %c0_i32_0 : i32, i32
  }
  func.func @transform_11(%arg0: i32) -> (i32, i32) {
    %c0_i32 = arith.constant 0 : i32
    %c0_i32_0 = arith.constant 0 : i32
    return %arg0, %c0_i32 : i32, i32
  }
}

</mosaic_0001>

<llo_original>
// kernel: continuous_transition_forward_slab.1
$region0: #{continuous_transition_forward_slab.1}
  #allocation0 [shape = 'u32[]', space=smem, size = 0x4, offset = 0x4, fixed_abs, tag = 'smem constant byte address 0x4 - core index']
  #allocation1 [shape = 'u32[72,128]{1,0:T(1,128)}', space=vmem, size = 0x9000, scoped, tag = 'internal scratch']
  %s0 = inlined_call_operand.vmem [shape: bf16[16,32], index: 0, kind: input, shape index: {}]
  %s1 = inlined_call_operand.vmem [shape: bf16[16,4], index: 1, kind: input, shape index: {}]
  %s2 = inlined_call_operand.vmem [shape: bf16[32,64], index: 2, kind: input, shape index: {}]
  %s3 = inlined_call_operand.vmem [shape: bf16[4,64], index: 3, kind: input, shape index: {}]
  %s4 = inlined_call_operand.vmem [shape: f32[1,64], index: 4, kind: input, shape index: {}]
  %s5 = inlined_call_operand.vmem [shape: bf16[64,64], index: 5, kind: input, shape index: {}]
  %s6 = inlined_call_operand.vmem [shape: f32[1,64], index: 6, kind: input, shape index: {}]
  %s7 = inlined_call_operand.vmem [shape: bf16[64,128], index: 7, kind: input, shape index: {}]
  %s8 = inlined_call_operand.vmem [shape: f32[1,128], index: 8, kind: input, shape index: {}]
  %s9 = inlined_call_operand.vmem [shape: bf16[128,40], index: 9, kind: input, shape index: {}]
  %s10 = inlined_call_operand.vmem [shape: f32[1,40], index: 10, kind: input, shape index: {}]
  %s11 = inlined_call_operand.vmem [shape: f32[16,40], index: 11, kind: output, shape index: {}]
  %s12 = sld [smem:[#allocation0]]
  $region77: #{continuous_transition_forward_slab.1} parent=0
    _
  %s14 = ssub.s32 1, %s12
  %s15 = scalar_select 0, %s14, %s12
  loop: start=0, step=1, limit=4
  $region2: #{continuous_transition_forward_slab.1} parent=0 // loop_pre_header
    _
  $region3: #{continuous_transition_forward_slab.1} parent=0 // loop_header
    %s17 = sphi 0, %s21
    %p18 = scmp.ge.s32.totalorder %s17, 4
    %s27 = sphi 0, %s29
    %s30 = sphi 0, %s27
    %s31 = sphi 0, %s30
    %s47 = sphi 0, %s31
    %s53 = sphi 0, %s55
    %s56 = sphi 0, %s53
    %s57 = sphi 0, %s56
    %s73 = sphi 0, %s57
    %s77 = sphi 0, %s77
    %s79 = sphi 0, %s77
    %s80 = sphi 0, %s79
    %s94 = sphi 0, %s80
    %s98 = sphi 0, %s98
    %s100 = sphi 0, %s98
    %s101 = sphi 0, %s100
    %s115 = sphi 0, %s101
    %s119 = sphi 0, %s119
    %s121 = sphi 0, %s119
    %s122 = sphi 0, %s121
    %s136 = sphi 0, %s122
    %s140 = sphi 0, %s140
    %s142 = sphi 0, %s140
    %s143 = sphi 0, %s142
    %s157 = sphi 0, %s143
    %s161 = sphi 0, %s161
    %s163 = sphi 0, %s161
    %s164 = sphi 0, %s163
    %s178 = sphi 0, %s164
    %s182 = sphi 0, %s182
    %s184 = sphi 0, %s182
    %s185 = sphi 0, %s184
    %s199 = sphi 0, %s185
    %s203 = sphi 0, %s203
    %s205 = sphi 0, %s203
    %s206 = sphi 0, %s205
    %s220 = sphi 0, %s206
    %s224 = sphi 0, %s224
    %s226 = sphi 0, %s224
    %s227 = sphi 0, %s226
    %s241 = sphi 0, %s227
    %s245 = sphi 0, %s245
    %s247 = sphi 0, %s245
    %s248 = sphi 0, %s247
    %s262 = sphi 0, %s248
    %s268 = sphi 0, %s270
    %s271 = sphi 0, %s268
    %s272 = sphi 0, %s271
    %s288 = sphi 0, %s272
  $region4: #{continuous_transition_forward_slab.1} parent=0 // loop_header_branch
    %20 = sbr.rel (%p18) target = $region8
  $region5: #{continuous_transition_forward_slab.1} parent=0 // loop_body
    %s22 = ssub.s32 %s17, 1
    %s23 = ssub.s32 %s17, 2
    %s24 = sadd.s32 %s17, 1
    %s25 = ssub.s32 %s17, %s24
    %p26 = scmp.eq.s32.totalorder %s25, 0
    %s28 = sadd.s32 %s27, 1
    %s29 = scalar_select %p26, %s27, %s28
    %p32 = pneg %p26
    %p33 = scmp.eq.s32.totalorder %s17, 1
    %p34 = por %p32, %p33
    %p35 = scmp.ne.s32.totalorder %s27, %s30
    %p36 = scmp.eq.s32.totalorder %s17, 0
    %p37 = por %p35, %p36
    %p38 = scmp.ne.s32.totalorder %s27, %s30
    %p39 = scmp.eq.s32.totalorder %s22, 1
    %p40 = por %p38, %p39
    %p41 = scmp.ne.s32.totalorder %s30, %s31
    %p42 = scmp.eq.s32.totalorder %s22, 0
    %p43 = por %p41, %p42
    %p44 = scmp.ne.s32.totalorder %s30, %s31
    %p45 = scmp.eq.s32.totalorder %s23, 1
    %p46 = por %p44, %p45
    %p48 = scmp.ne.s32.totalorder %s31, %s47
    %p49 = scmp.eq.s32.totalorder %s23, 0
    %p50 = por %p48, %p49
    %s51 = ssub.s32 %s17, %s24
    %p52 = scmp.eq.s32.totalorder %s51, 0
    %s54 = sadd.s32 %s53, 1
    %s55 = scalar_select %p52, %s53, %s54
    %p58 = pneg %p52
    %p59 = scmp.eq.s32.totalorder %s17, 1
    %p60 = por %p58, %p59
    %p61 = scmp.ne.s32.totalorder %s53, %s56
    %p62 = scmp.eq.s32.totalorder %s17, 0
    %p63 = por %p61, %p62
    %p64 = scmp.ne.s32.totalorder %s53, %s56
    %p65 = scmp.eq.s32.totalorder %s22, 1
    %p66 = por %p64, %p65
    %p67 = scmp.ne.s32.totalorder %s56, %s57
    %p68 = scmp.eq.s32.totalorder %s22, 0
    %p69 = por %p67, %p68
    %p70 = scmp.ne.s32.totalorder %s56, %s57
    %p71 = scmp.eq.s32.totalorder %s23, 1
    %p72 = por %p70, %p71
    %p74 = scmp.ne.s32.totalorder %s57, %s73
    %p75 = scmp.eq.s32.totalorder %s23, 0
    %p76 = por %p74, %p75
    %s78 = sadd.s32 %s77, 1
    %p81 = scmp.eq.s32.totalorder %s17, 1
    %p82 = scmp.ne.s32.totalorder %s77, %s79
    %p83 = scmp.eq.s32.totalorder %s17, 0
    %p84 = por %p82, %p83
    %p85 = scmp.ne.s32.totalorder %s77, %s79
    %p86 = scmp.eq.s32.totalorder %s22, 1
    %p87 = por %p85, %p86
    %p88 = scmp.ne.s32.totalorder %s79, %s80
    %p89 = scmp.eq.s32.totalorder %s22, 0
    %p90 = por %p88, %p89
    %p91 = scmp.ne.s32.totalorder %s79, %s80
    %p92 = scmp.eq.s32.totalorder %s23, 1
    %p93 = por %p91, %p92
    %p95 = scmp.ne.s32.totalorder %s80, %s94
    %p96 = scmp.eq.s32.totalorder %s23, 0
    %p97 = por %p95, %p96
    %s99 = sadd.s32 %s98, 1
    %p102 = scmp.eq.s32.totalorder %s17, 1
    %p103 = scmp.ne.s32.totalorder %s98, %s100
    %p104 = scmp.eq.s32.totalorder %s17, 0
    %p105 = por %p103, %p104
    %p106 = scmp.ne.s32.totalorder %s98, %s100
    %p107 = scmp.eq.s32.totalorder %s22, 1
    %p108 = por %p106, %p107
    %p109 = scmp.ne.s32.totalorder %s100, %s101
    %p110 = scmp.eq.s32.totalorder %s22, 0
    %p111 = por %p109, %p110
    %p112 = scmp.ne.s32.totalorder %s100, %s101
    %p113 = scmp.eq.s32.totalorder %s23, 1
    %p114 = por %p112, %p113
    %p116 = scmp.ne.s32.totalorder %s101, %s115
    %p117 = scmp.eq.s32.totalorder %s23, 0
    %p118 = por %p116, %p117
    %s120 = sadd.s32 %s119, 1
    %p123 = scmp.eq.s32.totalorder %s17, 1
    %p124 = scmp.ne.s32.totalorder %s119, %s121
    %p125 = scmp.eq.s32.totalorder %s17, 0
    %p126 = por %p124, %p125
    %p127 = scmp.ne.s32.totalorder %s119, %s121
    %p128 = scmp.eq.s32.totalorder %s22, 1
    %p129 = por %p127, %p128
    %p130 = scmp.ne.s32.totalorder %s121, %s122
    %p131 = scmp.eq.s32.totalorder %s22, 0
    %p132 = por %p130, %p131
    %p133 = scmp.ne.s32.totalorder %s121, %s122
    %p134 = scmp.eq.s32.totalorder %s23, 1
    %p135 = por %p133, %p134
    %p137 = scmp.ne.s32.totalorder %s122, %s136
    %p138 = scmp.eq.s32.totalorder %s23, 0
    %p139 = por %p137, %p138
    %s141 = sadd.s32 %s140, 1
    %p144 = scmp.eq.s32.totalorder %s17, 1
    %p145 = scmp.ne.s32.totalorder %s140, %s142
    %p146 = scmp.eq.s32.totalorder %s17, 0
    %p147 = por %p145, %p146
    %p148 = scmp.ne.s32.totalorder %s140, %s142
    %p149 = scmp.eq.s32.totalorder %s22, 1
    %p150 = por %p148, %p149
    %p151 = scmp.ne.s32.totalorder %s142, %s143
    %p152 = scmp.eq.s32.totalorder %s22, 0
    %p153 = por %p151, %p152
    %p154 = scmp.ne.s32.totalorder %s142, %s143
    %p155 = scmp.eq.s32.totalorder %s23, 1
    %p156 = por %p154, %p155
    %p158 = scmp.ne.s32.totalorder %s143, %s157
    %p159 = scmp.eq.s32.totalorder %s23, 0
    %p160 = por %p158, %p159
    %s162 = sadd.s32 %s161, 1
    %p165 = scmp.eq.s32.totalorder %s17, 1
    %p166 = scmp.ne.s32.totalorder %s161, %s163
    %p167 = scmp.eq.s32.totalorder %s17, 0
    %p168 = por %p166, %p167
    %p169 = scmp.ne.s32.totalorder %s161, %s163
    %p170 = scmp.eq.s32.totalorder %s22, 1
    %p171 = por %p169, %p170
    %p172 = scmp.ne.s32.totalorder %s163, %s164
    %p173 = scmp.eq.s32.totalorder %s22, 0
    %p174 = por %p172, %p173
    %p175 = scmp.ne.s32.totalorder %s163, %s164
    %p176 = scmp.eq.s32.totalorder %s23, 1
    %p177 = por %p175, %p176
    %p179 = scmp.ne.s32.totalorder %s164, %s178
    %p180 = scmp.eq.s32.totalorder %s23, 0
    %p181 = por %p179, %p180
    %s183 = sadd.s32 %s182, 1
    %p186 = scmp.eq.s32.totalorder %s17, 1
    %p187 = scmp.ne.s32.totalorder %s182, %s184
    %p188 = scmp.eq.s32.totalorder %s17, 0
    %p189 = por %p187, %p188
    %p190 = scmp.ne.s32.totalorder %s182, %s184
    %p191 = scmp.eq.s32.totalorder %s22, 1
    %p192 = por %p190, %p191
    %p193 = scmp.ne.s32.totalorder %s184, %s185
    %p194 = scmp.eq.s32.totalorder %s22, 0
    %p195 = por %p193, %p194
    %p196 = scmp.ne.s32.totalorder %s184, %s185
    %p197 = scmp.eq.s32.totalorder %s23, 1
    %p198 = por %p196, %p197
    %p200 = scmp.ne.s32.totalorder %s185, %s199
    %p201 = scmp.eq.s32.totalorder %s23, 0
    %p202 = por %p200, %p201
    %s204 = sadd.s32 %s203, 1
    %p207 = scmp.eq.s32.totalorder %s17, 1
    %p208 = scmp.ne.s32.totalorder %s203, %s205
    %p209 = scmp.eq.s32.totalorder %s17, 0
    %p210 = por %p208, %p209
    %p211 = scmp.ne.s32.totalorder %s203, %s205
    %p212 = scmp.eq.s32.totalorder %s22, 1
    %p213 = por %p211, %p212
    %p214 = scmp.ne.s32.totalorder %s205, %s206
    %p215 = scmp.eq.s32.totalorder %s22, 0
    %p216 = por %p214, %p215
    %p217 = scmp.ne.s32.totalorder %s205, %s206
    %p218 = scmp.eq.s32.totalorder %s23, 1
    %p219 = por %p217, %p218
    %p221 = scmp.ne.s32.totalorder %s206, %s220
    %p222 = scmp.eq.s32.totalorder %s23, 0
    %p223 = por %p221, %p222
    %s225 = sadd.s32 %s224, 1
    %p228 = scmp.eq.s32.totalorder %s17, 1
    %p229 = scmp.ne.s32.totalorder %s224, %s226
    %p230 = scmp.eq.s32.totalorder %s17, 0
    %p231 = por %p229, %p230
    %p232 = scmp.ne.s32.totalorder %s224, %s226
    %p233 = scmp.eq.s32.totalorder %s22, 1
    %p234 = por %p232, %p233
    %p235 = scmp.ne.s32.totalorder %s226, %s227
    %p236 = scmp.eq.s32.totalorder %s22, 0
    %p237 = por %p235, %p236
    %p238 = scmp.ne.s32.totalorder %s226, %s227
    %p239 = scmp.eq.s32.totalorder %s23, 1
    %p240 = por %p238, %p239
    %p242 = scmp.ne.s32.totalorder %s227, %s241
    %p243 = scmp.eq.s32.totalorder %s23, 0
    %p244 = por %p242, %p243
    %s246 = sadd.s32 %s245, 1
    %p249 = scmp.eq.s32.totalorder %s17, 1
    %p250 = scmp.ne.s32.totalorder %s245, %s247
    %p251 = scmp.eq.s32.totalorder %s17, 0
    %p252 = por %p250, %p251
    %p253 = scmp.ne.s32.totalorder %s245, %s247
    %p254 = scmp.eq.s32.totalorder %s22, 1
    %p255 = por %p253, %p254
    %p256 = scmp.ne.s32.totalorder %s247, %s248
    %p257 = scmp.eq.s32.totalorder %s22, 0
    %p258 = por %p256, %p257
    %p259 = scmp.ne.s32.totalorder %s247, %s248
    %p260 = scmp.eq.s32.totalorder %s23, 1
    %p261 = por %p259, %p260
    %p263 = scmp.ne.s32.totalorder %s248, %s262
    %p264 = scmp.eq.s32.totalorder %s23, 0
    %p265 = por %p263, %p264
    %s266 = ssub.s32 %s17, %s24
    %p267 = scmp.eq.s32.totalorder %s266, 0
    %s269 = sadd.s32 %s268, 1
    %s270 = scalar_select %p267, %s268, %s269
    %p273 = pneg %p267
    %p274 = scmp.eq.s32.totalorder %s17, 1
    %p275 = por %p273, %p274
    %p276 = scmp.ne.s32.totalorder %s268, %s271
    %p277 = scmp.eq.s32.totalorder %s17, 0
    %p278 = por %p276, %p277
    %p279 = scmp.ne.s32.totalorder %s268, %s271
    %p280 = scmp.eq.s32.totalorder %s22, 1
    %p281 = por %p279, %p280
    %p282 = scmp.ne.s32.totalorder %s271, %s272
    %p283 = scmp.eq.s32.totalorder %s22, 0
    %p284 = por %p282, %p283
    %p285 = scmp.ne.s32.totalorder %s271, %s272
    %p286 = scmp.eq.s32.totalorder %s23, 1
    %p287 = por %p285, %p286
    %p289 = scmp.ne.s32.totalorder %s272, %s288
    %p290 = scmp.eq.s32.totalorder %s23, 0
    %p291 = por %p289, %p290
    %p292 = scmp.le.s32.totalorder 1, %s17
    %p293 = scmp.lt.s32.totalorder %s17, 3
    %p294 = pnand %p292, %p293
    %p295 = pneg %p294
    // Predicated region
    $region9: #{continuous_transition_forward_slab.1} parent=5 // pred_check
      _
    $region10: #{continuous_transition_forward_slab.1} parent=5 // pred_check_branch
      %297 = sbr.rel (%p294) target = $region12
    $region11: #{continuous_transition_forward_slab.1} parent=5 // pred_region
      %s298 = ssub.s32 %s17, 1
      // Predicated region
      $region13: #{continuous_transition_forward_slab.1} parent=11 // pred_check
        %p299 = pneg %p90
      $region14: #{continuous_transition_forward_slab.1} parent=11 // pred_check_branch
        %301 = sbr.rel (%p299) target = $region16
      $region15: #{continuous_transition_forward_slab.1} parent=11 // pred_region
        _
      $region16: #{continuous_transition_forward_slab.1} parent=11 // pred_fallthru
        _
      // Predicated region
      $region17: #{continuous_transition_forward_slab.1} parent=11 // pred_check
        %p302 = pneg %p111
      $region18: #{continuous_transition_forward_slab.1} parent=11 // pred_check_branch
        %304 = sbr.rel (%p302) target = $region20
      $region19: #{continuous_transition_forward_slab.1} parent=11 // pred_region
        _
      $region20: #{continuous_transition_forward_slab.1} parent=11 // pred_fallthru
        _
      // Predicated region
      $region21: #{continuous_transition_forward_slab.1} parent=11 // pred_check
        %p305 = pneg %p132
      $region22: #{continuous_transition_forward_slab.1} parent=11 // pred_check_branch
        %307 = sbr.rel (%p305) target = $region24
      $region23: #{continuous_transition_forward_slab.1} parent=11 // pred_region
        _
      $region24: #{continuous_transition_forward_slab.1} parent=11 // pred_fallthru
        _
      // Predicated region
      $region25: #{continuous_transition_forward_slab.1} parent=11 // pred_check
        %p308 = pneg %p153
      $region26: #{continuous_transition_forward_slab.1} parent=11 // pred_check_branch
        %310 = sbr.rel (%p308) target = $region28
      $region27: #{continuous_transition_forward_slab.1} parent=11 // pred_region
        _
      $region28: #{continuous_transition_forward_slab.1} parent=11 // pred_fallthru
        _
      // Predicated region
      $region29: #{continuous_transition_forward_slab.1} parent=11 // pred_check
        %p311 = pneg %p174
      $region30: #{continuous_transition_forward_slab.1} parent=11 // pred_check_branch
        %313 = sbr.rel (%p311) target = $region32
      $region31: #{continuous_transition_forward_slab.1} parent=11 // pred_region
        _
      $region32: #{continuous_transition_forward_slab.1} parent=11 // pred_fallthru
        _
      // Predicated region
      $region33: #{continuous_transition_forward_slab.1} parent=11 // pred_check
        %p314 = pneg %p195
      $region34: #{continuous_transition_forward_slab.1} parent=11 // pred_check_branch
        %316 = sbr.rel (%p314) target = $region36
      $region35: #{continuous_transition_forward_slab.1} parent=11 // pred_region
        _
      $region36: #{continuous_transition_forward_slab.1} parent=11 // pred_fallthru
        _
      // Predicated region
      $region37: #{continuous_transition_forward_slab.1} parent=11 // pred_check
        %p317 = pneg %p216
      $region38: #{continuous_transition_forward_slab.1} parent=11 // pred_check_branch
        %319 = sbr.rel (%p317) target = $region40
      $region39: #{continuous_transition_forward_slab.1} parent=11 // pred_region
        _
      $region40: #{continuous_transition_forward_slab.1} parent=11 // pred_fallthru
        _
      // Predicated region
      $region41: #{continuous_transition_forward_slab.1} parent=11 // pred_check
        %p320 = pneg %p237
      $region42: #{continuous_transition_forward_slab.1} parent=11 // pred_check_branch
        %322 = sbr.rel (%p320) target = $region44
      $region43: #{continuous_transition_forward_slab.1} parent=11 // pred_region
        _
      $region44: #{continuous_transition_forward_slab.1} parent=11 // pred_fallthru
        _
      // Predicated region
      $region45: #{continuous_transition_forward_slab.1} parent=11 // pred_check
        %p323 = pneg %p258
      $region46: #{continuous_transition_forward_slab.1} parent=11 // pred_check_branch
        %325 = sbr.rel (%p323) target = $region48
      $region47: #{continuous_transition_forward_slab.1} parent=11 // pred_region
        _
      $region48: #{continuous_transition_forward_slab.1} parent=11 // pred_fallthru
        _
    $region12: #{continuous_transition_forward_slab.1} parent=5 // pred_fallthru
      _
    %p326 = scmp.lt.s32.totalorder %s17, 2
    // Predicated region
    $region49: #{continuous_transition_forward_slab.1} parent=5 // pred_check
      %p327 = pneg %p326
    $region50: #{continuous_transition_forward_slab.1} parent=5 // pred_check_branch
      %329 = sbr.rel (%p327) target = $region52
    $region51: #{continuous_transition_forward_slab.1} parent=5 // pred_region
      // Predicated region
      $region53: #{continuous_transition_forward_slab.1} parent=51 // pred_check
        %p330 = pneg %p37
      $region54: #{continuous_transition_forward_slab.1} parent=51 // pred_check_branch
        %332 = sbr.rel (%p330) target = $region56
      $region55: #{continuous_transition_forward_slab.1} parent=51 // pred_region
        %p333 = scmp.lt.s32.totalorder %s17, 1
        %s334 = scalar_select %p333, %s17, 1
        %s335 = smul.addr %s334, 4
        %s336 = scalar_lea.vmem %s0, %s335
      $region56: #{continuous_transition_forward_slab.1} parent=51 // pred_fallthru
        _
      // Predicated region
      $region57: #{continuous_transition_forward_slab.1} parent=51 // pred_check
        %p337 = pneg %p63
      $region58: #{continuous_transition_forward_slab.1} parent=51 // pred_check_branch
        %339 = sbr.rel (%p337) target = $region60
      $region59: #{continuous_transition_forward_slab.1} parent=51 // pred_region
        %p340 = scmp.lt.s32.totalorder %s17, 1
        %s341 = scalar_select %p340, %s17, 1
        %s342 = smul.addr %s341, 4
        %s343 = scalar_lea.vmem %s1, %s342
      $region60: #{continuous_transition_forward_slab.1} parent=51 // pred_fallthru
        _
    $region52: #{continuous_transition_forward_slab.1} parent=5 // pred_fallthru
      _
    %p344 = scmp.le.s32.totalorder 1, %s17
    %p345 = scmp.lt.s32.totalorder %s17, 3
    %p346 = pnand %p344, %p345
    %p347 = pneg %p346
    // Predicated region
    $region61: #{continuous_transition_forward_slab.1} parent=5 // pred_check
      _
    $region62: #{continuous_transition_forward_slab.1} parent=5 // pred_check_branch
      %349 = sbr.rel (%p346) target = $region64
    $region63: #{continuous_transition_forward_slab.1} parent=5 // pred_region
      %s350 = ssub.s32 %s17, 1
      %p351 = scmp.lt.s32.totalorder %s22, 1
      %s352 = scalar_select %p351, %s22, 1
      %s353 = smul.addr %s352, 4
      %s354 = scalar_lea.vmem %s0, %s353
      %p355 = pneg %p43
      %p356 = pneg %p40
      %p357 = scmp.lt.s32.totalorder %s22, 1
      %s358 = scalar_select %p357, %s22, 1
      %s359 = smul.addr %s358, 4
      %s360 = scalar_lea.vmem %s1, %s359
      %p361 = pneg %p69
      %p362 = pneg %p66
      %p363 = pneg %p90
      %p364 = pneg %p87
      %p365 = pneg %p111
      %p366 = pneg %p108
      %p367 = pneg %p132
      %p368 = pneg %p129
      %p369 = pneg %p153
      %p370 = pneg %p150
      %p371 = pneg %p174
      %p372 = pneg %p171
      %p373 = pneg %p195
      %p374 = pneg %p192
      %p375 = pneg %p216
      %p376 = pneg %p213
      %p377 = pneg %p237
      %p378 = pneg %p234
      %p379 = pneg %p258
      %p380 = pneg %p255
      %p381 = pneg %p284
      %p382 = pneg %p281
      %p383 = scmp.lt.s32.totalorder %s22, 1
      %s384 = scalar_select %p383, %s22, 1
      %s385 = smul.addr %s384, 8
      %s386 = scalar_lea.vmem %s11, %s385
      %p387 = scmp.lt.s32.totalorder %s22, 1
      %s388 = scalar_select %p387, %s22, 1
      %s389 = smul.addr %s388, 4
      %s390 = scalar_lea.vmem %s0, %s389
      %p391 = scmp.lt.s32.totalorder %s22, 1
      %s392 = scalar_select %p391, %s22, 1
      %s393 = smul.addr %s392, 4
      %s394 = scalar_lea.vmem %s1, %s393
      %p395 = scmp.lt.s32.totalorder %s22, 1
      %s396 = scalar_select %p395, %s22, 1
      %s397 = smul.addr %s396, 8
      %s398 = scalar_lea.vmem %s11, %s397
      %v400 = vld [vmem:[%s390] sm:$0xf]
      %v401 = vld [vmem:[%s394] sm:$0xf]
      %v402 = vld [vmem:[%s2] sm:$0xf]
      %v403 = vld [vmem:[%s2 + $0x4] sm:$0xf]
      %v404 = vld [vmem:[%s2 + $0x8] sm:$0xf]
      %v405 = vld [vmem:[%s2 + $0xc] sm:$0xf]
      %v406 = vld [vmem:[%s3] sm:$0x3]
      %vm407 = vcmask 31744
      %v409 = vsel %vm407, %v401, 0
      %vm411 = vcmask 1041408
      %v413 = vsel %vm411, %v406, 0
      %415 = vmatpush.bf16.msra.mxu0 0
      %416 = vmatpush.bf16.msra.mxu0 0
      %417 = vmatpush.bf16.msra.mxu0 0
      %418 = vmatpush.bf16.msra.mxu0 0
      %419 = vmatpush.bf16.msra.mxu0 0
      %420 = vmatpush.bf16.msra.mxu0 0
      %421 = vmatpush.bf16.msra.mxu0 0
      %422 = vmatpush.bf16.msra.mxu0 %v413
      %423 = vmatmul.bf16.gmra.mxu0 %v409
      %v424 = vpop.f32.mrf.mxu0
      %v425 = vadd.f32 0.0, %v424
      %v426 = vpop.f32.mrf.mxu0
      %427 = vdwg.mxu0
      %v432 = vunpack.c.l.b16 %v402
      %v433 = vunpack.c.l.b16 %v403
      %v434 = vunpack.c.l.b16 %v404
      %v435 = vunpack.c.l.b16 %v405
      %v436 = vpack.c.b16 %v433, %v432
      %v437 = vpack.c.b16 %v435, %v434
      %vm440 = vcmask 261120
      %v442 = vsel %vm440, %v400, 0
      %444 = vmatpush.bf16.msra.mxu0 0
      %445 = vmatpush.bf16.msra.mxu0 0
      %446 = vmatpush.bf16.msra.mxu0 0
      %447 = vmatpush.bf16.msra.mxu0 0
      %448 = vmatpush.bf16.msra.mxu0 0
      %449 = vmatpush.bf16.msra.mxu0 0
      %450 = vmatpush.bf16.msra.mxu0 %v437
      %451 = vmatpush.bf16.msra.mxu0 %v436
      %452 = vmatmul.bf16.gmra.mxu0 %v442
      %v453 = vpop.f32.mrf.mxu0
      %v454 = vadd.f32 %v425, %v453
      %v455 = vpop.f32.mrf.mxu0
      %456 = vdwg.mxu0
      %v457 = vld [vmem:[%s4] sm:$0x1]
      %v459 = vperm.slane %v457, 0
      %v461 = vadd.f32 %v454, %v459
      %v462 = vmax.f32 %v461, 0.0
      %v463 = vpack.c.bf16 %v462, %v462
      %v464 = vld [vmem:[%s5] sm:$0xf]
      %v465 = vld [vmem:[%s5 + $0x4] sm:$0xf]
      %v466 = vld [vmem:[%s5 + $0x8] sm:$0xf]
      %v467 = vld [vmem:[%s5 + $0xc] sm:$0xf]
      %v468 = vld [vmem:[%s5 + $0x10] sm:$0xf]
      %v469 = vld [vmem:[%s5 + $0x14] sm:$0xf]
      %v470 = vld [vmem:[%s5 + $0x18] sm:$0xf]
      %v471 = vld [vmem:[%s5 + $0x1c] sm:$0xf]
      %v472 = vld [vmem:[%s6] sm:$0x1]
      %v474 = vperm.slane %v472, 0
      %v484 = vunpack.c.l.b16 %v464
      %v485 = vunpack.c.l.b16 %v465
      %v486 = vunpack.c.l.b16 %v466
      %v487 = vunpack.c.l.b16 %v467
      %v488 = vunpack.c.l.b16 %v468
      %v489 = vunpack.c.l.b16 %v469
      %v490 = vunpack.c.l.b16 %v470
      %v491 = vunpack.c.l.b16 %v471
      %v492 = vpack.c.b16 %v485, %v484
      %v493 = vpack.c.b16 %v487, %v486
      %v494 = vpack.c.b16 %v489, %v488
      %v495 = vpack.c.b16 %v491, %v490
      %vm500 = vcmask 523264
      %v502 = vsel %vm500, %v463, 0
      %504 = vmatpush.bf16.msra.mxu0 0
      %505 = vmatpush.bf16.msra.mxu0 0
      %506 = vmatpush.bf16.msra.mxu0 0
      %507 = vmatpush.bf16.msra.mxu0 0
      %508 = vmatpush.bf16.msra.mxu0 %v495
      %509 = vmatpush.bf16.msra.mxu0 %v494
      %510 = vmatpush.bf16.msra.mxu0 %v493
      %511 = vmatpush.bf16.msra.mxu0 %v492
      %512 = vmatmul.bf16.gmra.mxu0 %v502
      %v513 = vpop.f32.mrf.mxu0
      %v514 = vadd.f32 %v474, %v513
      %v515 = vpop.f32.mrf.mxu0
      %516 = vdwg.mxu0
      %v517 = vmax.f32 %v514, 0.0
      %v518 = vpack.c.bf16 %v517, %v517
      %v519 = vld [vmem:[%s7] sm:$0xf]
      %v520 = vld [vmem:[%s7 + $0x4] sm:$0xf]
      %v521 = vld [vmem:[%s7 + $0x8] sm:$0xf]
      %v522 = vld [vmem:[%s7 + $0xc] sm:$0xf]
      %v523 = vld [vmem:[%s7 + $0x10] sm:$0xf]
      %v524 = vld [vmem:[%s7 + $0x14] sm:$0xf]
      %v525 = vld [vmem:[%s7 + $0x18] sm:$0xf]
      %v526 = vld [vmem:[%s7 + $0x1c] sm:$0xf]
      %v527 = vld [vmem:[%s8] sm:$0x1]
      %v529 = vperm.slane %v527, 0
      %v539 = vunpack.c.l.b16 %v519
      %v540 = vunpack.c.l.b16 %v520
      %v541 = vunpack.c.l.b16 %v521
      %v542 = vunpack.c.l.b16 %v522
      %v543 = vunpack.c.l.b16 %v523
      %v544 = vunpack.c.l.b16 %v524
      %v545 = vunpack.c.l.b16 %v525
      %v546 = vunpack.c.l.b16 %v526
      %v547 = vpack.c.b16 %v540, %v539
      %v548 = vpack.c.b16 %v542, %v541
      %v549 = vpack.c.b16 %v544, %v543
      %v550 = vpack.c.b16 %v546, %v545
      %v556 = vsel %vm500, %v518, 0
      %558 = vmatpush.bf16.msra.mxu0 0
      %559 = vmatpush.bf16.msra.mxu0 0
      %560 = vmatpush.bf16.msra.mxu0 0
      %561 = vmatpush.bf16.msra.mxu0 0
      %562 = vmatpush.bf16.msra.mxu0 %v550
      %563 = vmatpush.bf16.msra.mxu0 %v549
      %564 = vmatpush.bf16.msra.mxu0 %v548
      %565 = vmatpush.bf16.msra.mxu0 %v547
      %566 = vmatmul.bf16.gmra.mxu0 %v556
      %v567 = vpop.f32.mrf.mxu0
      %v568 = vadd.f32 %v529, %v567
      %v569 = vpop.f32.mrf.mxu0
      %570 = vdwg.mxu0
      %v571 = vmax.f32 %v568, 0.0
      %v572 = vpack.c.bf16 %v571, %v571
      %v573 = vld [vmem:[%s9] sm:$0xf]
      %v574 = vld [vmem:[%s9 + $0x4] sm:$0xf]
      %v575 = vld [vmem:[%s9 + $0x8] sm:$0xf]
      %v576 = vld [vmem:[%s9 + $0xc] sm:$0xf]
      %v577 = vld [vmem:[%s9 + $0x10] sm:$0xf]
      %v578 = vld [vmem:[%s9 + $0x14] sm:$0xf]
      %v579 = vld [vmem:[%s9 + $0x18] sm:$0xf]
      %v580 = vld [vmem:[%s9 + $0x1c] sm:$0xf]
      %v581 = vld [vmem:[%s9 + $0x20] sm:$0xf]
      %v582 = vld [vmem:[%s9 + $0x24] sm:$0xf]
      %v583 = vld [vmem:[%s9 + $0x28] sm:$0xf]
      %v584 = vld [vmem:[%s9 + $0x2c] sm:$0xf]
      %v585 = vld [vmem:[%s9 + $0x30] sm:$0xf]
      %v586 = vld [vmem:[%s9 + $0x34] sm:$0xf]
      %v587 = vld [vmem:[%s9 + $0x38] sm:$0xf]
      %v588 = vld [vmem:[%s9 + $0x3c] sm:$0xf]
      %v589 = vld [vmem:[%s10] sm:$0x1]
      %v591 = vperm.slane %v589, 0
      %v609 = vunpack.c.l.b16 %v573
      %v610 = vunpack.c.l.b16 %v574
      %v611 = vunpack.c.l.b16 %v575
      %v612 = vunpack.c.l.b16 %v576
      %v613 = vunpack.c.l.b16 %v577
      %v614 = vunpack.c.l.b16 %v578
      %v615 = vunpack.c.l.b16 %v579
      %v616 = vunpack.c.l.b16 %v580
      %v617 = vunpack.c.l.b16 %v581
      %v618 = vunpack.c.l.b16 %v582
      %v619 = vunpack.c.l.b16 %v583
      %v620 = vunpack.c.l.b16 %v584
      %v621 = vunpack.c.l.b16 %v585
      %v622 = vunpack.c.l.b16 %v586
      %v623 = vunpack.c.l.b16 %v587
      %v624 = vunpack.c.l.b16 %v588
      %v625 = vpack.c.b16 %v610, %v609
      %v626 = vpack.c.b16 %v612, %v611
      %v627 = vpack.c.b16 %v614, %v613
      %v628 = vpack.c.b16 %v616, %v615
      %v629 = vpack.c.b16 %v618, %v617
      %v630 = vpack.c.b16 %v620, %v619
      %v631 = vpack.c.b16 %v622, %v621
      %v632 = vpack.c.b16 %v624, %v623
      %641 = vmatpush.bf16.msra.mxu0 %v632
      %642 = vmatpush.bf16.msra.mxu0 %v631
      %643 = vmatpush.bf16.msra.mxu0 %v630
      %644 = vmatpush.bf16.msra.mxu0 %v629
      %645 = vmatpush.bf16.msra.mxu0 %v628
      %646 = vmatpush.bf16.msra.mxu0 %v627
      %647 = vmatpush.bf16.msra.mxu0 %v626
      %648 = vmatpush.bf16.msra.mxu0 %v625
      %649 = vmatmul.bf16.gmra.mxu0 %v572
      %v650 = vpop.f32.mrf.mxu0
      %v651 = vadd.f32 %v591, %v650
      %v652 = vpop.f32.mrf.mxu0
      %653 = vdwg.mxu0
      %v654 = vlaneseq
      %v655 = vand.u32 %v654, 127
      %vm656 = vcmp.eq.s32.totalorder %v655, 33
      %v657 = vxor.u32 %v651, 2147483648
      %v658 = vmul.f32 %v657, 1.442695
      %v659 = vpow.pop %v658
      %v660 = vadd.f32 %v659, 1.0
      %v661 = vrcp.pop %v660
      %v662 = vmul.f32 %v660, %v661
      %v663 = vsub.f32 1.0, %v662
      %v664 = vmul.f32 %v661, %v663
      %v665 = vadd.f32 %v661, %v664
      %vm666 = vweird.f32 %v660
      %vm667 = vweird.f32 %v661
      %vm668 = vmor %vm666, %vm667
      %v669 = vsel %vm668, %v661, %v665
      %v670 = vand.u32 2147483647, %v660
      %vm671 = vcmp.eq.f32.partialorder %v670, 8.507059e+37
      %v672 = vand.u32 %v660, 2147483648
      %v673 = vor.u32 1.1754944e-38, %v672
      %v674 = vsel %vm671, %v673, %v669
      %v675 = vmul.f32 1.0, %v674
      %v676 = vsel %vm656, %v675, %v651
      %vm677 = vcmask 326656
      %678 = vst.msk [vmem:[%s398] sm:$0xff] %vm677, %v676
      %p679 = scmp.lt.s32.totalorder %s22, 1
      %s680 = scalar_select %p679, %s22, 1
      %s681 = smul.addr %s680, 8
      %s682 = scalar_lea.vmem %s11, %s681
      // Predicated region
      $region65: #{continuous_transition_forward_slab.1} parent=63 // pred_check
        %p683 = pneg %p281
      $region66: #{continuous_transition_forward_slab.1} parent=63 // pred_check_branch
        %685 = sbr.rel (%p683) target = $region68
      $region67: #{continuous_transition_forward_slab.1} parent=63 // pred_region
        _
      $region68: #{continuous_transition_forward_slab.1} parent=63 // pred_fallthru
        _
    $region64: #{continuous_transition_forward_slab.1} parent=5 // pred_fallthru
      _
    %p686 = scmp.le.s32.totalorder 2, %s17
    // Predicated region
    $region69: #{continuous_transition_forward_slab.1} parent=5 // pred_check
      %p687 = pneg %p686
    $region70: #{continuous_transition_forward_slab.1} parent=5 // pred_check_branch
      %689 = sbr.rel (%p687) target = $region72
    $region71: #{continuous_transition_forward_slab.1} parent=5 // pred_region
      %s690 = ssub.s32 %s17, 2
      // Predicated region
      $region73: #{continuous_transition_forward_slab.1} parent=71 // pred_check
        %p691 = pneg %p287
      $region74: #{continuous_transition_forward_slab.1} parent=71 // pred_check_branch
        %693 = sbr.rel (%p691) target = $region76
      $region75: #{continuous_transition_forward_slab.1} parent=71 // pred_region
        %p694 = scmp.lt.s32.totalorder %s23, 1
        %s695 = scalar_select %p694, %s23, 1
        %s696 = smul.addr %s695, 8
        %s697 = scalar_lea.vmem %s11, %s696
      $region76: #{continuous_transition_forward_slab.1} parent=71 // pred_fallthru
        _
    $region72: #{continuous_transition_forward_slab.1} parent=5 // pred_fallthru
      _
  $region6: #{continuous_transition_forward_slab.1} parent=0 // loop_footer
    %s21 = sadd.s32 1, %s17
  $region7: #{continuous_transition_forward_slab.1} parent=0 // loop_footer_branch
    %16 = sbr.rel target = $region3
  $region8: #{continuous_transition_forward_slab.1} parent=0 // loop_exit
    _

</llo_original>
